<compile_context>
chip_gen: v6e
topology: v6e:2x2x1
jax: 0.10.0
libtpu: 0.0.40
codegen_flags: <defaults>
</compile_context>

<pallas_src>
import functools

import jax
import jax.numpy as jnp
from jax.experimental import pallas as pl
from jax.experimental.pallas import tpu as pltpu


def actor_kernel(obs_ref, w_ref, b_ref, out_ref, *,
                 d0, u1, u2, h1n, h2n, a,
                 r_wx, r_wh1, r_wm1h2, r_wm2, r_wm3):
    """Fused OFENet.phi1 + mu MLP for one batch tile.

    w_ref : single weight slab (compute dtype, bf16 by default); each layer's
            weight lives at a statically known, 16-row-aligned row offset.
    b_ref : (8, Wb) f32 bias slab; row r holds the bias of layer r.
    Static slab slices are cheap VMEM reads; all dots accumulate in f32.
    """
    cdt = w_ref.dtype
    f32 = jnp.float32

    x = obs_ref[...].astype(cdt)                                      # (TB, D0)

    # One matmul covers every consumer of x: w1 | w2[:D0] | wm1[:D0].
    rx = jnp.dot(x, w_ref[r_wx:r_wx + d0, :u1 + u2 + h1n],
                 preferred_element_type=f32)                          # (TB, U1+U2+H1)

    h1 = jax.nn.relu(rx[:, :u1] + b_ref[0:1, :u1])                    # (TB, U1)

    # One matmul covers every consumer of h1: w2[D0:] | wm1[D0:D0+U1].
    rh1 = jnp.dot(h1.astype(cdt), w_ref[r_wh1:r_wh1 + u1, :u2 + h1n],
                  preferred_element_type=f32)                         # (TB, U2+H1)

    h2 = jax.nn.relu(rx[:, u1:u1 + u2] + rh1[:, :u2] + b_ref[1:2, :u2])

    # mu layer 1 consumes latent = [x, h1, h2] via the split contributions.
    z = jax.nn.relu(
        rx[:, u1 + u2:u1 + u2 + h1n]
        + rh1[:, u2:u2 + h1n]
        + jnp.dot(h2.astype(cdt), w_ref[r_wm1h2:r_wm1h2 + u2, :h1n],
                  preferred_element_type=f32)
        + b_ref[2:3, :h1n])                                           # (TB, H1)

    z = jax.nn.relu(
        jnp.dot(z.astype(cdt), w_ref[r_wm2:r_wm2 + h1n, :h2n],
                preferred_element_type=f32)
        + b_ref[3:4, :h2n])                                           # (TB, H2)

    out_ref[...] = jnp.tanh(
        jnp.dot(z.astype(cdt), w_ref[r_wm3:r_wm3 + h2n, :a],
                preferred_element_type=f32)
        + b_ref[4:5, :a])                                             # (TB, A)


def prepare_weights(params, state_dim, *, compute_dtype=jnp.bfloat16):
    """One-time weight preprocessing (hoisted out of the per-call path).

    Splits the DenseNet-concat weights, re-fuses the shared-LHS pieces along
    their output axes, and packs everything into:
      * one compute-dtype weight slab (rows 16-aligned per section), and
      * one small f32 bias slab (one row per bias).
    """
    D0 = state_dim
    U1 = params["w1"].shape[1]
    U2 = params["w2"].shape[1]
    H1 = params["wm1"].shape[1]
    H2 = params["wm2"].shape[1]
    A = params["wm3"].shape[1]

    w2x, w2h = params["w2"][:D0], params["w2"][D0:]
    wm1x = params["wm1"][:D0]
    wm1h1 = params["wm1"][D0:D0 + U1]
    wm1h2 = params["wm1"][D0 + U1:]

    wx = jnp.concatenate([params["w1"], w2x, wm1x], axis=1)    # (D0, U1+U2+H1)
    wh1 = jnp.concatenate([w2h, wm1h1], axis=1)                # (U1, U2+H1)

    sections = [wx, wh1, wm1h2, params["wm2"], params["wm3"]]
    W = 128 * pl.cdiv(max(s.shape[1] for s in sections), 128)

    ALIGN = 16  # bf16 sublane tile; also fine for f32
    rows, offsets, r = [], [], 0
    for s in sections:
        offsets.append(r)
        n = ALIGN * pl.cdiv(s.shape[0], ALIGN)
        rows.append(jnp.pad(s, ((0, n - s.shape[0]), (0, W - s.shape[1]))))
        r += n
    w_slab = jnp.concatenate(rows, axis=0).astype(compute_dtype)  # (R, W)

    biases = [params["b1"], params["b2"], params["bm1"],
              params["bm2"], params["bm3"]]
    Wb = 128 * pl.cdiv(max(b.shape[0] for b in biases), 128)
    b_rows = [jnp.pad(b.reshape(1, -1).astype(jnp.float32),
                      ((0, 0), (0, Wb - b.shape[0]))) for b in biases]
    b_rows.append(jnp.zeros((8 - len(biases), Wb), jnp.float32))
    b_slab = jnp.concatenate(b_rows, axis=0)                      # (8, Wb)

    dims = dict(d0=D0, u1=U1, u2=U2, h1n=H1, h2n=H2, a=A,
                r_wx=offsets[0], r_wh1=offsets[1], r_wm1h2=offsets[2],
                r_wm2=offsets[3], r_wm3=offsets[4])
    return dict(w_slab=w_slab, b_slab=b_slab, dims=dims, action_dim=A)


def _pick_tile(B):
    b8 = 8 * pl.cdiv(B, 8)
    if b8 >= 512:
        # Big-enough batches: large tiles for DMA efficiency, but always >= 2
        # grid steps so the "parallel" axis can shard across v7x's two TCs.
        return min(2048, 8 * pl.cdiv(b8 // 2, 8))
    return b8  # small batches: one step, no padding


def actor_forward(obs, prep, *, tile_b=None):
    B, D0 = obs.shape
    dims = prep["dims"]
    A = prep["action_dim"]

    if tile_b is None:
        tile_b = _pick_tile(B)
    tile_b = max(8, 8 * pl.cdiv(tile_b, 8))

    # Pad only when the batch is not tile-aligned (no-op for typical batches).
    B_pad = tile_b * pl.cdiv(B, tile_b)
    obs_p = obs if B_pad == B else jnp.pad(obs, ((0, B_pad - B), (0, 0)))

    w_slab, b_slab = prep["w_slab"], prep["b_slab"]
    kernel = functools.partial(actor_kernel, **dims)

    out = pl.pallas_call(
        kernel,
        out_shape=jax.ShapeDtypeStruct((B_pad, A), jnp.float32),
        grid=(B_pad // tile_b,),
        in_specs=[
            pl.BlockSpec((tile_b, D0), lambda i: (i, 0)),
            pl.BlockSpec(w_slab.shape, lambda i: (0, 0)),
            pl.BlockSpec(b_slab.shape, lambda i: (0, 0)),
        ],
        out_specs=pl.BlockSpec((tile_b, A), lambda i: (i, 0)),
        compiler_params=pltpu.CompilerParams(
            dimension_semantics=("parallel",)),
    )(obs_p, w_slab, b_slab)

    return out if B_pad == B else out[:B]


def actor_forward_ref(obs, params):
    """Pure-JAX f32 reference (mirrors the PyTorch module)."""
    x = obs
    h1 = jax.nn.relu(x @ params["w1"] + params["b1"])
    x1 = jnp.concatenate([x, h1], axis=-1)
    h2 = jax.nn.relu(x1 @ params["w2"] + params["b2"])
    latent = jnp.concatenate([x1, h2], axis=-1)
    z = jax.nn.relu(latent @ params["wm1"] + params["bm1"])
    z = jax.nn.relu(z @ params["wm2"] + params["bm2"])
    return jnp.tanh(z @ params["wm3"] + params["bm3"])


def init_params(key, state_dim, srl_units, net_arch, action_dim):
    """Deterministic synthetic initialization (uniform fan-in scaling)."""
    U1, U2 = srl_units
    latent_dim = state_dim + U1 + U2
    H1, H2 = net_arch
    shapes = {
        "w1": (state_dim, U1), "b1": (U1,),
        "w2": (state_dim + U1, U2), "b2": (U2,),
        "wm1": (latent_dim, H1), "bm1": (H1,),
        "wm2": (H1, H2), "bm2": (H2,),
        "wm3": (H2, action_dim), "bm3": (action_dim,),
    }
    params = {}
    for name, shape in shapes.items():
        key, sub = jax.random.split(key)
        fan_in = shape[0]
        scale = 1.0 / jnp.sqrt(jnp.float32(fan_in))
        params[name] = jax.random.uniform(
            sub, shape, jnp.float32, minval=-scale, maxval=scale)
    return params


if __name__ == "__main__":
    # Small shapes consistent with the module: vector observations, MLP actor.
    B = 16                 # batch
    STATE_DIM = 32         # features_dim1 (flatten extractor output)
    SRL_UNITS = (32, 32)   # srl_net_arch -> latent_obs_dim = 32+32+32 = 96
    NET_ARCH = (64, 64)    # mu hidden layers
    ACTION_DIM = 8

    key = jax.random.PRNGKey(0)
    key, kobs = jax.random.split(key)
    obs = jax.random.normal(kobs, (B, STATE_DIM), dtype=jnp.float32)

    params = init_params(key, STATE_DIM, SRL_UNITS, NET_ARCH, ACTION_DIM)
    prep = prepare_weights(params, STATE_DIM)   # one-time weight prep (bf16)

    out = actor_forward(obs, prep)
    out = jax.block_until_ready(out)

    ref = actor_forward_ref(obs, params)
    assert out.shape == (B, ACTION_DIM)
    # bf16 MXU operands (f32 accumulation) -> loosened tolerance vs f32 ref.
    assert jnp.allclose(out, ref, atol=5e-2, rtol=5e-2), "mismatch vs reference"

    print("KERNEL_OK")
</pallas_src>

<mosaic_0001>
module attributes {stable_mosaic.version = 11 : i64} {
  func.func @actor_kernel(%arg0: i32, %arg1: memref<16x32xf32, #tpu.memory_space<vmem>>, %arg2: memref<224x128xbf16, #tpu.memory_space<vmem>>, %arg3: memref<8x128xf32, #tpu.memory_space<vmem>>, %arg4: memref<16x8xf32, #tpu.memory_space<vmem>>) attributes {dimension_semantics = [#tpu.dimension_semantics<parallel>], iteration_bounds = array<i64: 1>, scalar_prefetch = 0 : i64, scratch_operands = 0 : i64, tpu.core_type = #tpu.core_type<tc>, window_params = [{transform_indices = @transform_0, window_bounds = array<i64: 16, 32>}, {pipeline_mode = #tpu.pipeline_mode<synchronous>, transform_indices = @transform_1, window_bounds = array<i64: 224, 128>}, {pipeline_mode = #tpu.pipeline_mode<synchronous>, transform_indices = @transform_2, window_bounds = array<i64: 8, 128>}, {transform_indices = @transform_3, window_bounds = array<i64: 16, 8>}]} {
    %c0 = arith.constant 0 : index
    %c0_0 = arith.constant 0 : index
    %0 = vector.load %arg1[%c0, %c0_0] : memref<16x32xf32, #tpu.memory_space<vmem>>, vector<16x32xf32>
    %1 = arith.truncf %0 : vector<16x32xf32> to vector<16x32xbf16>
    %c0_1 = arith.constant 0 : index
    %c0_2 = arith.constant 0 : index
    %2 = vector.load %arg2[%c0_1, %c0_2] : memref<224x128xbf16, #tpu.memory_space<vmem>>, vector<32x128xbf16>
    %cst = arith.constant dense<0.000000e+00> : vector<16x128xf32>
    %3 = tpu.matmul %1, %2, %cst {dimension_numbers = #tpu.dot_dimension_numbers<[1], [0], [0], [1], [0, 0, 1, 1], [], []>} : vector<16x32xbf16>, vector<32x128xbf16>, vector<16x128xf32> -> vector<16x128xf32>
    %4 = vector.extract_strided_slice %3 {offsets = [0, 0], sizes = [16, 32], strides = [1, 1]} : vector<16x128xf32> to vector<16x32xf32>
    %c0_3 = arith.constant 0 : index
    %c0_4 = arith.constant 0 : index
    %5 = vector.load %arg3[%c0_3, %c0_4] : memref<8x128xf32, #tpu.memory_space<vmem>>, vector<1x32xf32>
    %6 = vector.broadcast %5 : vector<1x32xf32> to vector<16x32xf32>
    %7 = arith.addf %4, %6 : vector<16x32xf32>
    %cst_5 = arith.constant 0.000000e+00 : f32
    %8 = vector.broadcast %cst_5 : f32 to vector<16x32xf32>
    %9 = arith.maximumf %7, %8 : vector<16x32xf32>
    %10 = arith.truncf %9 : vector<16x32xf32> to vector<16x32xbf16>
    %c32 = arith.constant 32 : index
    %c0_6 = arith.constant 0 : index
    %11 = vector.load %arg2[%c32, %c0_6] : memref<224x128xbf16, #tpu.memory_space<vmem>>, vector<32x96xbf16>
    %cst_7 = arith.constant dense<0.000000e+00> : vector<16x96xf32>
    %12 = tpu.matmul %10, %11, %cst_7 {dimension_numbers = #tpu.dot_dimension_numbers<[1], [0], [0], [1], [0, 0, 1, 1], [], []>} : vector<16x32xbf16>, vector<32x96xbf16>, vector<16x96xf32> -> vector<16x96xf32>
    %13 = vector.extract_strided_slice %3 {offsets = [0, 32], sizes = [16, 32], strides = [1, 1]} : vector<16x128xf32> to vector<16x32xf32>
    %14 = vector.extract_strided_slice %12 {offsets = [0, 0], sizes = [16, 32], strides = [1, 1]} : vector<16x96xf32> to vector<16x32xf32>
    %15 = arith.addf %13, %14 : vector<16x32xf32>
    %c1 = arith.constant 1 : index
    %c0_8 = arith.constant 0 : index
    %16 = vector.load %arg3[%c1, %c0_8] : memref<8x128xf32, #tpu.memory_space<vmem>>, vector<1x32xf32>
    %17 = vector.broadcast %16 : vector<1x32xf32> to vector<16x32xf32>
    %18 = arith.addf %15, %17 : vector<16x32xf32>
    %cst_9 = arith.constant 0.000000e+00 : f32
    %19 = vector.broadcast %cst_9 : f32 to vector<16x32xf32>
    %20 = arith.maximumf %18, %19 : vector<16x32xf32>
    %21 = vector.extract_strided_slice %3 {offsets = [0, 64], sizes = [16, 64], strides = [1, 1]} : vector<16x128xf32> to vector<16x64xf32>
    %22 = vector.extract_strided_slice %12 {offsets = [0, 32], sizes = [16, 64], strides = [1, 1]} : vector<16x96xf32> to vector<16x64xf32>
    %23 = arith.addf %21, %22 : vector<16x64xf32>
    %24 = arith.truncf %20 : vector<16x32xf32> to vector<16x32xbf16>
    %c64 = arith.constant 64 : index
    %c0_10 = arith.constant 0 : index
    %25 = vector.load %arg2[%c64, %c0_10] : memref<224x128xbf16, #tpu.memory_space<vmem>>, vector<32x64xbf16>
    %cst_11 = arith.constant dense<0.000000e+00> : vector<16x64xf32>
    %26 = tpu.matmul %24, %25, %cst_11 {dimension_numbers = #tpu.dot_dimension_numbers<[1], [0], [0], [1], [0, 0, 1, 1], [], []>} : vector<16x32xbf16>, vector<32x64xbf16>, vector<16x64xf32> -> vector<16x64xf32>
    %27 = arith.addf %23, %26 : vector<16x64xf32>
    %c2 = arith.constant 2 : index
    %c0_12 = arith.constant 0 : index
    %28 = vector.load %arg3[%c2, %c0_12] : memref<8x128xf32, #tpu.memory_space<vmem>>, vector<1x64xf32>
    %29 = vector.broadcast %28 : vector<1x64xf32> to vector<16x64xf32>
    %30 = arith.addf %27, %29 : vector<16x64xf32>
    %cst_13 = arith.constant 0.000000e+00 : f32
    %31 = vector.broadcast %cst_13 : f32 to vector<16x64xf32>
    %32 = arith.maximumf %30, %31 : vector<16x64xf32>
    %33 = arith.truncf %32 : vector<16x64xf32> to vector<16x64xbf16>
    %c96 = arith.constant 96 : index
    %c0_14 = arith.constant 0 : index
    %34 = vector.load %arg2[%c96, %c0_14] : memref<224x128xbf16, #tpu.memory_space<vmem>>, vector<64x64xbf16>
    %cst_15 = arith.constant dense<0.000000e+00> : vector<16x64xf32>
    %35 = tpu.matmul %33, %34, %cst_15 {dimension_numbers = #tpu.dot_dimension_numbers<[1], [0], [0], [1], [0, 0, 1, 1], [], []>} : vector<16x64xbf16>, vector<64x64xbf16>, vector<16x64xf32> -> vector<16x64xf32>
    %c3 = arith.constant 3 : index
    %c0_16 = arith.constant 0 : index
    %36 = vector.load %arg3[%c3, %c0_16] : memref<8x128xf32, #tpu.memory_space<vmem>>, vector<1x64xf32>
    %37 = vector.broadcast %36 : vector<1x64xf32> to vector<16x64xf32>
    %38 = arith.addf %35, %37 : vector<16x64xf32>
    %cst_17 = arith.constant 0.000000e+00 : f32
    %39 = vector.broadcast %cst_17 : f32 to vector<16x64xf32>
    %40 = arith.maximumf %38, %39 : vector<16x64xf32>
    %41 = arith.truncf %40 : vector<16x64xf32> to vector<16x64xbf16>
    %c160 = arith.constant 160 : index
    %c0_18 = arith.constant 0 : index
    %42 = vector.load %arg2[%c160, %c0_18] : memref<224x128xbf16, #tpu.memory_space<vmem>>, vector<64x8xbf16>
    %cst_19 = arith.constant dense<0.000000e+00> : vector<16x8xf32>
    %43 = tpu.matmul %41, %42, %cst_19 {dimension_numbers = #tpu.dot_dimension_numbers<[1], [0], [0], [1], [0, 0, 1, 1], [], []>} : vector<16x64xbf16>, vector<64x8xbf16>, vector<16x8xf32> -> vector<16x8xf32>
    %c4 = arith.constant 4 : index
    %c0_20 = arith.constant 0 : index
    %44 = vector.load %arg3[%c4, %c0_20] : memref<8x128xf32, #tpu.memory_space<vmem>>, vector<1x8xf32>
    %45 = vector.broadcast %44 : vector<1x8xf32> to vector<16x8xf32>
    %46 = arith.addf %43, %45 : vector<16x8xf32>
    %47 = math.tanh %46 : vector<16x8xf32>
    %c0_21 = arith.constant 0 : index
    %c0_22 = arith.constant 0 : index
    %48 = vector.load %arg4[%c0_21, %c0_22] : memref<16x8xf32, #tpu.memory_space<vmem>>, vector<16x8xf32>
    tpu.vector_store %arg4[%c0_21, %c0_22], %47 {strides = array<i32>} : memref<16x8xf32, #tpu.memory_space<vmem>>, vector<16x8xf32>,
    return
  }
  func.func @transform_0(%arg0: i32) -> (i32, i32) {
    %c0_i32 = arith.constant 0 : i32
    %c0_i32_0 = arith.constant 0 : i32
    return %arg0, %c0_i32 : i32, i32
  }
  func.func @transform_1(%arg0: i32) -> (i32, i32) {
    %c0_i32 = arith.constant 0 : i32
    %c0_i32_0 = arith.constant 0 : i32
    %c0_i32_1 = arith.constant 0 : i32
    return %c0_i32, %c0_i32_0 : i32, i32
  }
  func.func @transform_2(%arg0: i32) -> (i32, i32) {
    %c0_i32 = arith.constant 0 : i32
    %c0_i32_0 = arith.constant 0 : i32
    %c0_i32_1 = arith.constant 0 : i32
    return %c0_i32, %c0_i32_0 : i32, i32
  }
  func.func @transform_3(%arg0: i32) -> (i32, i32) {
    %c0_i32 = arith.constant 0 : i32
    %c0_i32_0 = arith.constant 0 : i32
    return %arg0, %c0_i32 : i32, i32
  }
}

</mosaic_0001>

<llo_original>
// kernel: tpu_custom_call.1
$region0: #{tpu_custom_call.1}
  #allocation0 [shape = 'u32[]', space=smem, size = 0x4, offset = 0x4, fixed_abs, tag = 'smem constant byte address 0x4 - core index']
  #allocation1 [shape = 'u32[144,128]{1,0:T(1,128)}', space=vmem, size = 0x12000, scoped, tag = 'internal scratch']
  %s0 = inlined_call_operand.hbm [shape: f32[16,32], index: 0, kind: input, shape index: {}]
  %s1 = inlined_call_operand.hbm [shape: bf16[224,128], index: 1, kind: input, shape index: {}]
  %s2 = inlined_call_operand.hbm [shape: f32[8,128], index: 2, kind: input, shape index: {}]
  %s3 = inlined_call_operand.vmem [shape: f32[16,8], index: 3, kind: output, shape index: {}]
  %s4 = sld [smem:[#allocation0]]
  $region34: #{tpu_custom_call.1} parent=0
    _
  %s6 = ssub.s32 1, %s4
  %s7 = scalar_select 0, %s6, %s4
  $region1: #{tpu_custom_call.1} parent=0
    #allocation2 [shape = 'u8[8192]{0}', space=vmem, size = 0x2000, scoped, tag = 'input window, operand 0, single buffered']
    #allocation3 [shape = 's32[1]{0}', space=sflag, size = 0x4, scoped, tag = 'scoped memory for tpu_custom_call.1']
    #allocation4 [shape = 'u8[57344]{0}', space=vmem, size = 0xe000, scoped, tag = 'input window, operand 1, single buffered']
    #allocation5 [shape = 's32[1]{0}', space=sflag, size = 0x4, scoped, tag = 'scoped memory for tpu_custom_call.1']
    #allocation6 [shape = 'u8[4096]{0}', space=vmem, size = 0x1000, scoped, tag = 'input window, operand 2, single buffered']
    %8 = vsyncpa [#allocation3], 0
    %9 = vsyncpa [#allocation5], 0
    // Predicated region
    $region2: #{tpu_custom_call.1} parent=1 // pred_check
      _
    $region3: #{tpu_custom_call.1} parent=1 // pred_check_branch
      %11 = sbr.rel (0) target = $region5
    $region4: #{tpu_custom_call.1} parent=1 // pred_region
      %s13 = ssub.s32 256, 256
      %14 = vsyncadd [#allocation3], %s13
      %s15 = sshll.u32 [#allocation2], 4
      %s16 = int_to_ptr.vmem [resolvable:$true] %s15
      %21 = dma.hbm_to_vmem [thread:$0]  %s0, 256, %s16, [#allocation3], 128, 128, 8
    $region5: #{tpu_custom_call.1} parent=1 // pred_fallthru
      _
    // Predicated region
    $region6: #{tpu_custom_call.1} parent=1 // pred_check
      _
    $region7: #{tpu_custom_call.1} parent=1 // pred_check_branch
      %23 = sbr.rel (0) target = $region9
    $region8: #{tpu_custom_call.1} parent=1 // pred_region
      %s25 = ssub.s32 1792, 1792
      %26 = vsyncadd [#allocation5], %s25
      %s27 = sshll.u32 [#allocation4], 4
      %s28 = int_to_ptr.vmem [resolvable:$true] %s27
      %33 = dma.hbm_to_vmem [thread:$0]  %s1, 1792, %s28, [#allocation5], 64, 64, 4
    $region9: #{tpu_custom_call.1} parent=1 // pred_fallthru
      _
    // Predicated region
    $region10: #{tpu_custom_call.1} parent=1 // pred_check
      _
    $region11: #{tpu_custom_call.1} parent=1 // pred_check_branch
      %35 = sbr.rel (0) target = $region13
    $region12: #{tpu_custom_call.1} parent=1 // pred_region
      %s37 = ssub.s32 128, 128
      %38 = vsyncadd [#allocation5], %s37
      %s40 = sshll.u32 [#allocation6], 4
      %s41 = int_to_ptr.vmem [resolvable:$true] %s40
      %43 = dma.hbm_to_vmem [thread:$0]  %s2, 128, %s41, [#allocation5]
    $region13: #{tpu_custom_call.1} parent=1 // pred_fallthru
      _
    // Predicated region
    $region14: #{tpu_custom_call.1} parent=1 // pred_check
      _
    $region15: #{tpu_custom_call.1} parent=1 // pred_check_branch
      %45 = sbr.rel (0) target = $region17
    $region16: #{tpu_custom_call.1} parent=1 // pred_region
      %46 = dma.done [#allocation3], 256
    $region17: #{tpu_custom_call.1} parent=1 // pred_fallthru
      _
    // Predicated region
    $region18: #{tpu_custom_call.1} parent=1 // pred_check
      _
    $region19: #{tpu_custom_call.1} parent=1 // pred_check_branch
      %48 = sbr.rel (0) target = $region21
    $region20: #{tpu_custom_call.1} parent=1 // pred_region
      %49 = dma.done [#allocation5], 1792
    $region21: #{tpu_custom_call.1} parent=1 // pred_fallthru
      _
    // Predicated region
    $region22: #{tpu_custom_call.1} parent=1 // pred_check
      _
    $region23: #{tpu_custom_call.1} parent=1 // pred_check_branch
      %51 = sbr.rel (0) target = $region25
    $region24: #{tpu_custom_call.1} parent=1 // pred_region
      %52 = dma.done [#allocation5], 128
    $region25: #{tpu_custom_call.1} parent=1 // pred_fallthru
      _
    %v54 = vld [vmem:[#allocation2] sm:$0xff]
    %v55 = vld [vmem:[#allocation2 + $0x8] sm:$0xff]
    %v56 = vpack.c.bf16 %v55, %v54
    %v57 = vld [vmem:[#allocation4] sm:$0xf]
    %v58 = vld [vmem:[#allocation4 + $0x4] sm:$0xf]
    %v59 = vld [vmem:[#allocation4 + $0x8] sm:$0xf]
    %v60 = vld [vmem:[#allocation4 + $0xc] sm:$0xf]
    %v65 = vunpack.c.l.b16 %v57
    %v66 = vunpack.c.l.b16 %v58
    %v67 = vunpack.c.l.b16 %v59
    %v68 = vunpack.c.l.b16 %v60
    %v69 = vpack.c.b16 %v66, %v65
    %v70 = vpack.c.b16 %v68, %v67
    %vm73 = vcmask 261120
    %v75 = vsel %vm73, %v56, 0
    %77 = vmatprep.subr.bf16.mxu0 0
    %78 = vmatpush1.bf16.msra.mxu0 0
    %79 = vmatprep.subr.bf16.mxu0 0
    %80 = vmatpush1.bf16.msra.mxu0 0
    %81 = vmatprep.subr.bf16.mxu0 0
    %82 = vmatpush1.bf16.msra.mxu0 0
    %83 = vmatprep.subr.bf16.mxu0 0
    %84 = vmatpush1.bf16.msra.mxu0 0
    %85 = vmatprep.subr.bf16.mxu0 0
    %86 = vmatpush1.bf16.msra.mxu0 0
    %87 = vmatprep.subr.bf16.mxu0 0
    %88 = vmatpush1.bf16.msra.mxu0 0
    %89 = vmatprep.subr.bf16.mxu0 0
    %90 = vmatpush1.bf16.msra.mxu0 %v70
    %91 = vmatprep.subr.bf16.mxu0 0
    %92 = vmatpush1.bf16.msra.mxu0 %v69
    %93 = vmatprep.subr.bf16.mxu0 0
    %94 = vmatpush2.bf16.msra.mxu0 0
    %95 = vmatprep.subr.bf16.mxu0 0
    %96 = vmatpush2.bf16.msra.mxu0 0
    %97 = vmatprep.subr.bf16.mxu0 0
    %98 = vmatpush2.bf16.msra.mxu0 0
    %99 = vmatprep.subr.bf16.mxu0 0
    %100 = vmatpush2.bf16.msra.mxu0 0
    %101 = vmatprep.subr.bf16.mxu0 0
    %102 = vmatpush2.bf16.msra.mxu0 0
    %103 = vmatprep.subr.bf16.mxu0 0
    %104 = vmatpush2.bf16.msra.mxu0 0
    %105 = vmatprep.subr.bf16.mxu0 0
    %106 = vmatpush2.bf16.msra.mxu0 0
    %107 = vmatprep.subr.bf16.mxu0 0
    %108 = vmatpush2.bf16.msra.mxu0 0
    %109 = vmatprep.mubr.bf16.mxu0 0
    %110 = vmatmul.mubr.bf16.gmra.mxu0 %v75
    %v111 = vpop.f32.mrf.mxu0
    %v112 = vadd.f32 0.0, %v111
    %v113 = vpop.f32.mrf.mxu0
    %v114 = vpop.f32.mrf.mxu0
    %v115 = vadd.f32 0.0, %v114
    %v116 = vpop.f32.mrf.mxu0
    %117 = vdwg.mxu0
    %v118 = vld [vmem:[#allocation6] sm:$0x1]
    %v119 = vlaneseq
    %v120 = vshrl.u32 %v119, 7
    %v121 = vsub.s32 0, %v120
    %v122 = vrot.slane %v118, %v121
    %v123 = vadd.f32 %v112, %v122
    %v124 = vadd.f32 %v115, %v122
    %v125 = vmax.f32 %v123, 0.0
    %v126 = vmax.f32 %v124, 0.0
    %v127 = vpack.c.bf16 %v126, %v125
    %v128 = vld [vmem:[#allocation4 + $0x10] sm:$0xf]
    %v129 = vld [vmem:[#allocation4 + $0x14] sm:$0xf]
    %v130 = vld [vmem:[#allocation4 + $0x18] sm:$0xf]
    %v131 = vld [vmem:[#allocation4 + $0x1c] sm:$0xf]
    %v136 = vunpack.c.l.b16 %v128
    %v137 = vunpack.c.l.b16 %v129
    %v138 = vunpack.c.l.b16 %v130
    %v139 = vunpack.c.l.b16 %v131
    %v140 = vpack.c.b16 %v137, %v136
    %v141 = vpack.c.b16 %v139, %v138
    %v145 = vsel %vm73, %v127, 0
    %147 = vmatprep.subr.bf16.mxu0 0
    %148 = vmatpush1.bf16.msra.mxu0 0
    %149 = vmatprep.subr.bf16.mxu0 0
    %150 = vmatpush1.bf16.msra.mxu0 0
    %151 = vmatprep.subr.bf16.mxu0 0
    %152 = vmatpush1.bf16.msra.mxu0 0
    %153 = vmatprep.subr.bf16.mxu0 0
    %154 = vmatpush1.bf16.msra.mxu0 0
    %155 = vmatprep.subr.bf16.mxu0 0
    %156 = vmatpush1.bf16.msra.mxu0 0
    %157 = vmatprep.subr.bf16.mxu0 0
    %158 = vmatpush1.bf16.msra.mxu0 0
    %159 = vmatprep.subr.bf16.mxu0 0
    %160 = vmatpush1.bf16.msra.mxu0 %v141
    %161 = vmatprep.subr.bf16.mxu0 0
    %162 = vmatpush1.bf16.msra.mxu0 %v140
    %163 = vmatprep.subr.bf16.mxu0 0
    %164 = vmatpush2.bf16.msra.mxu0 0
    %165 = vmatprep.subr.bf16.mxu0 0
    %166 = vmatpush2.bf16.msra.mxu0 0
    %167 = vmatprep.subr.bf16.mxu0 0
    %168 = vmatpush2.bf16.msra.mxu0 0
    %169 = vmatprep.subr.bf16.mxu0 0
    %170 = vmatpush2.bf16.msra.mxu0 0
    %171 = vmatprep.subr.bf16.mxu0 0
    %172 = vmatpush2.bf16.msra.mxu0 0
    %173 = vmatprep.subr.bf16.mxu0 0
    %174 = vmatpush2.bf16.msra.mxu0 0
    %175 = vmatprep.subr.bf16.mxu0 0
    %176 = vmatpush2.bf16.msra.mxu0 0
    %177 = vmatprep.subr.bf16.mxu0 0
    %178 = vmatpush2.bf16.msra.mxu0 0
    %179 = vmatprep.mubr.bf16.mxu0 0
    %180 = vmatmul.mubr.bf16.gmra.mxu0 %v145
    %v181 = vpop.f32.mrf.mxu0
    %v182 = vadd.f32 0.0, %v181
    %v183 = vpop.f32.mrf.mxu0
    %v184 = vpop.f32.mrf.mxu0
    %v185 = vadd.f32 0.0, %v184
    %v186 = vpop.f32.mrf.mxu0
    %187 = vdwg.mxu0
    %190 = vrot.lane.b32.xlu0 %v182, 32
    %v191 = vpop.permute.xlu0 %190
    %192 = vrot.lane.b32.xlu0 %v185, 32
    %v193 = vpop.permute.xlu0 %192
    %v196 = vadd.f32 %v112, %v191
    %v197 = vadd.f32 %v115, %v193
    %v198 = vld [vmem:[#allocation6 + $0x1] sm:$0x1]
    %v199 = vlaneseq
    %v200 = vshrl.u32 %v199, 7
    %v201 = vsub.s32 0, %v200
    %v202 = vrot.slane %v198, %v201
    %204 = vrot.lane.b32.xlu0 %v202, 32
    %v205 = vpop.permute.xlu0 %204
    %v207 = vadd.f32 %v196, %v205
    %v208 = vadd.f32 %v197, %v205
    %v209 = vmax.f32 %v207, 0.0
    %v210 = vmax.f32 %v208, 0.0
    %v211 = vpack.c.bf16 %v210, %v209
    %v212 = vld [vmem:[#allocation4 + $0x20] sm:$0xf]
    %v213 = vld [vmem:[#allocation4 + $0x24] sm:$0xf]
    %v214 = vld [vmem:[#allocation4 + $0x28] sm:$0xf]
    %v215 = vld [vmem:[#allocation4 + $0x2c] sm:$0xf]
    %217 = vrot.lane.b32.xlu0 %v211, 96
    %v218 = vpop.permute.xlu0 %217
    %v223 = vunpack.c.l.b16 %v212
    %v224 = vunpack.c.l.b16 %v213
    %v225 = vunpack.c.l.b16 %v214
    %v226 = vunpack.c.l.b16 %v215
    %v227 = vpack.c.b16 %v224, %v223
    %v228 = vpack.c.b16 %v226, %v225
    %v232 = vsel %vm73, %v218, 0
    %234 = vmatprep.subr.bf16.mxu0 0
    %235 = vmatpush1.bf16.msra.mxu0 0
    %236 = vmatprep.subr.bf16.mxu0 0
    %237 = vmatpush1.bf16.msra.mxu0 0
    %238 = vmatprep.subr.bf16.mxu0 0
    %239 = vmatpush1.bf16.msra.mxu0 0
    %240 = vmatprep.subr.bf16.mxu0 0
    %241 = vmatpush1.bf16.msra.mxu0 0
    %242 = vmatprep.subr.bf16.mxu0 0
    %243 = vmatpush1.bf16.msra.mxu0 0
    %244 = vmatprep.subr.bf16.mxu0 0
    %245 = vmatpush1.bf16.msra.mxu0 0
    %246 = vmatprep.subr.bf16.mxu0 0
    %247 = vmatpush1.bf16.msra.mxu0 %v228
    %248 = vmatprep.subr.bf16.mxu0 0
    %249 = vmatpush1.bf16.msra.mxu0 %v227
    %250 = vmatprep.subr.bf16.mxu0 0
    %251 = vmatpush2.bf16.msra.mxu0 0
    %252 = vmatprep.subr.bf16.mxu0 0
    %253 = vmatpush2.bf16.msra.mxu0 0
    %254 = vmatprep.subr.bf16.mxu0 0
    %255 = vmatpush2.bf16.msra.mxu0 0
    %256 = vmatprep.subr.bf16.mxu0 0
    %257 = vmatpush2.bf16.msra.mxu0 0
    %258 = vmatprep.subr.bf16.mxu0 0
    %259 = vmatpush2.bf16.msra.mxu0 0
    %260 = vmatprep.subr.bf16.mxu0 0
    %261 = vmatpush2.bf16.msra.mxu0 0
    %262 = vmatprep.subr.bf16.mxu0 0
    %263 = vmatpush2.bf16.msra.mxu0 0
    %264 = vmatprep.subr.bf16.mxu0 0
    %265 = vmatpush2.bf16.msra.mxu0 0
    %266 = vmatprep.mubr.bf16.mxu0 0
    %267 = vmatmul.mubr.bf16.gmra.mxu0 %v232
    %v268 = vpop.f32.mrf.mxu0
    %v269 = vadd.f32 0.0, %v268
    %v270 = vpop.f32.mrf.mxu0
    %v271 = vpop.f32.mrf.mxu0
    %v272 = vadd.f32 0.0, %v271
    %v273 = vpop.f32.mrf.mxu0
    %274 = vdwg.mxu0
    %277 = vrot.lane.b32.xlu0 %v269, 64
    %v278 = vpop.permute.xlu0 %277
    %279 = vrot.lane.b32.xlu0 %v272, 64
    %v280 = vpop.permute.xlu0 %279
    %v283 = vadd.f32 %v196, %v278
    %v284 = vadd.f32 %v197, %v280
    %v285 = vld [vmem:[#allocation6 + $0x2] sm:$0x1]
    %v286 = vlaneseq
    %v287 = vshrl.u32 %v286, 7
    %v288 = vsub.s32 0, %v287
    %v289 = vrot.slane %v285, %v288
    %291 = vrot.lane.b32.xlu0 %v289, 64
    %v292 = vpop.permute.xlu0 %291
    %v294 = vadd.f32 %v283, %v292
    %v295 = vadd.f32 %v284, %v292
    %v296 = vmax.f32 %v294, 0.0
    %v297 = vmax.f32 %v295, 0.0
    %v298 = vpack.c.bf16 %v297, %v296
    %v299 = vld [vmem:[#allocation4 + $0x30] sm:$0xf]
    %v300 = vld [vmem:[#allocation4 + $0x34] sm:$0xf]
    %v301 = vld [vmem:[#allocation4 + $0x38] sm:$0xf]
    %v302 = vld [vmem:[#allocation4 + $0x3c] sm:$0xf]
    %v303 = vld [vmem:[#allocation4 + $0x40] sm:$0xf]
    %v304 = vld [vmem:[#allocation4 + $0x44] sm:$0xf]
    %v305 = vld [vmem:[#allocation4 + $0x48] sm:$0xf]
    %v306 = vld [vmem:[#allocation4 + $0x4c] sm:$0xf]
    %v307 = vld [vmem:[#allocation6 + $0x3] sm:$0x1]
    %v308 = vlaneseq
    %v309 = vshrl.u32 %v308, 7
    %v310 = vsub.s32 0, %v309
    %v311 = vrot.slane %v307, %v310
    %313 = vrot.lane.b32.xlu0 %v298, 64
    %v314 = vpop.permute.xlu0 %313
    %v323 = vunpack.c.l.b16 %v299
    %v324 = vunpack.c.l.b16 %v300
    %v325 = vunpack.c.l.b16 %v301
    %v326 = vunpack.c.l.b16 %v302
    %v327 = vunpack.c.l.b16 %v303
    %v328 = vunpack.c.l.b16 %v304
    %v329 = vunpack.c.l.b16 %v305
    %v330 = vunpack.c.l.b16 %v306
    %v331 = vpack.c.b16 %v324, %v323
    %v332 = vpack.c.b16 %v326, %v325
    %v333 = vpack.c.b16 %v328, %v327
    %v334 = vpack.c.b16 %v330, %v329
    %vm339 = vcmask 523264
    %v341 = vsel %vm339, %v314, 0
    %343 = vmatprep.subr.bf16.mxu0 0
    %344 = vmatpush1.bf16.msra.mxu0 0
    %345 = vmatprep.subr.bf16.mxu0 0
    %346 = vmatpush1.bf16.msra.mxu0 0
    %347 = vmatprep.subr.bf16.mxu0 0
    %348 = vmatpush1.bf16.msra.mxu0 0
    %349 = vmatprep.subr.bf16.mxu0 0
    %350 = vmatpush1.bf16.msra.mxu0 0
    %351 = vmatprep.subr.bf16.mxu0 0
    %352 = vmatpush1.bf16.msra.mxu0 %v334
    %353 = vmatprep.subr.bf16.mxu0 0
    %354 = vmatpush1.bf16.msra.mxu0 %v333
    %355 = vmatprep.subr.bf16.mxu0 0
    %356 = vmatpush1.bf16.msra.mxu0 %v332
    %357 = vmatprep.subr.bf16.mxu0 0
    %358 = vmatpush1.bf16.msra.mxu0 %v331
    %359 = vmatprep.subr.bf16.mxu0 0
    %360 = vmatpush2.bf16.msra.mxu0 0
    %361 = vmatprep.subr.bf16.mxu0 0
    %362 = vmatpush2.bf16.msra.mxu0 0
    %363 = vmatprep.subr.bf16.mxu0 0
    %364 = vmatpush2.bf16.msra.mxu0 0
    %365 = vmatprep.subr.bf16.mxu0 0
    %366 = vmatpush2.bf16.msra.mxu0 0
    %367 = vmatprep.subr.bf16.mxu0 0
    %368 = vmatpush2.bf16.msra.mxu0 0
    %369 = vmatprep.subr.bf16.mxu0 0
    %370 = vmatpush2.bf16.msra.mxu0 0
    %371 = vmatprep.subr.bf16.mxu0 0
    %372 = vmatpush2.bf16.msra.mxu0 0
    %373 = vmatprep.subr.bf16.mxu0 0
    %374 = vmatpush2.bf16.msra.mxu0 0
    %375 = vmatprep.mubr.bf16.mxu0 0
    %376 = vmatmul.mubr.bf16.gmra.mxu0 %v341
    %v377 = vpop.f32.mrf.mxu0
    %v378 = vadd.f32 %v311, %v377
    %v379 = vpop.f32.mrf.mxu0
    %v380 = vpop.f32.mrf.mxu0
    %v381 = vadd.f32 %v311, %v380
    %v382 = vpop.f32.mrf.mxu0
    %383 = vdwg.mxu0
    %v384 = vmax.f32 %v378, 0.0
    %v385 = vmax.f32 %v381, 0.0
    %v386 = vpack.c.bf16 %v385, %v384
    %v387 = vld [vmem:[#allocation4 + $0x50] sm:$0xf]
    %v388 = vld [vmem:[#allocation4 + $0x54] sm:$0xf]
    %v389 = vld [vmem:[#allocation4 + $0x58] sm:$0xf]
    %v390 = vld [vmem:[#allocation4 + $0x5c] sm:$0xf]
    %v391 = vld [vmem:[#allocation4 + $0x60] sm:$0xf]
    %v392 = vld [vmem:[#allocation4 + $0x64] sm:$0xf]
    %v393 = vld [vmem:[#allocation4 + $0x68] sm:$0xf]
    %v394 = vld [vmem:[#allocation4 + $0x6c] sm:$0xf]
    %v395 = vld [vmem:[#allocation6 + $0x4] sm:$0x1]
    %v396 = vlaneseq
    %v397 = vshrl.u32 %v396, 7
    %v398 = vsub.s32 0, %v397
    %v399 = vrot.slane %v395, %v398
    %v408 = vunpack.c.l.b16 %v387
    %v409 = vunpack.c.l.b16 %v388
    %v410 = vunpack.c.l.b16 %v389
    %v411 = vunpack.c.l.b16 %v390
    %v412 = vunpack.c.l.b16 %v391
    %v413 = vunpack.c.l.b16 %v392
    %v414 = vunpack.c.l.b16 %v393
    %v415 = vunpack.c.l.b16 %v394
    %v416 = vpack.c.b16 %v409, %v408
    %v417 = vpack.c.b16 %v411, %v410
    %v418 = vpack.c.b16 %v413, %v412
    %v419 = vpack.c.b16 %v415, %v414
    %v425 = vsel %vm339, %v386, 0
    %427 = vmatprep.subr.bf16.mxu0 0
    %428 = vmatpush1.bf16.msra.mxu0 0
    %429 = vmatprep.subr.bf16.mxu0 0
    %430 = vmatpush1.bf16.msra.mxu0 0
    %431 = vmatprep.subr.bf16.mxu0 0
    %432 = vmatpush1.bf16.msra.mxu0 0
    %433 = vmatprep.subr.bf16.mxu0 0
    %434 = vmatpush1.bf16.msra.mxu0 0
    %435 = vmatprep.subr.bf16.mxu0 0
    %436 = vmatpush1.bf16.msra.mxu0 %v419
    %437 = vmatprep.subr.bf16.mxu0 0
    %438 = vmatpush1.bf16.msra.mxu0 %v418
    %439 = vmatprep.subr.bf16.mxu0 0
    %440 = vmatpush1.bf16.msra.mxu0 %v417
    %441 = vmatprep.subr.bf16.mxu0 0
    %442 = vmatpush1.bf16.msra.mxu0 %v416
    %443 = vmatprep.subr.bf16.mxu0 0
    %444 = vmatpush2.bf16.msra.mxu0 0
    %445 = vmatprep.subr.bf16.mxu0 0
    %446 = vmatpush2.bf16.msra.mxu0 0
    %447 = vmatprep.subr.bf16.mxu0 0
    %448 = vmatpush2.bf16.msra.mxu0 0
    %449 = vmatprep.subr.bf16.mxu0 0
    %450 = vmatpush2.bf16.msra.mxu0 0
    %451 = vmatprep.subr.bf16.mxu0 0
    %452 = vmatpush2.bf16.msra.mxu0 0
    %453 = vmatprep.subr.bf16.mxu0 0
    %454 = vmatpush2.bf16.msra.mxu0 0
    %455 = vmatprep.subr.bf16.mxu0 0
    %456 = vmatpush2.bf16.msra.mxu0 0
    %457 = vmatprep.subr.bf16.mxu0 0
    %458 = vmatpush2.bf16.msra.mxu0 0
    %459 = vmatprep.mubr.bf16.mxu0 0
    %460 = vmatmul.mubr.bf16.gmra.mxu0 %v425
    %v461 = vpop.f32.mrf.mxu0
    %v462 = vadd.f32 %v399, %v461
    %v463 = vpop.f32.mrf.mxu0
    %v464 = vpop.f32.mrf.mxu0
    %v465 = vadd.f32 %v399, %v464
    %v466 = vpop.f32.mrf.mxu0
    %467 = vdwg.mxu0
    %v468 = vtanh.pop %v462
    %v469 = vtanh.pop %v465
    %vm470 = vcmask 64512
    %471 = vst.msk [vmem:[%s3] sm:$0xff] %vm470, %v468
    %472 = vst.msk [vmem:[%s3 + $0x8] sm:$0xff] %vm470, %v469
    // Predicated region
    $region26: #{tpu_custom_call.1} parent=1 // pred_check
      _
    $region27: #{tpu_custom_call.1} parent=1 // pred_check_branch
      %474 = sbr.rel (0) target = $region29
    $region28: #{tpu_custom_call.1} parent=1 // pred_region
      _
    $region29: #{tpu_custom_call.1} parent=1 // pred_fallthru
      _
    // Predicated region
    $region30: #{tpu_custom_call.1} parent=1 // pred_check
      _
    $region31: #{tpu_custom_call.1} parent=1 // pred_check_branch
      %476 = sbr.rel (0) target = $region33
    $region32: #{tpu_custom_call.1} parent=1 // pred_region
      _
    $region33: #{tpu_custom_call.1} parent=1 // pred_fallthru
      _
    %477 = vsyncpa [#allocation3], 1
    %478 = vsyncpa [#allocation5], 1

</llo_original>
